<compile_context>
chip_gen: v5e
topology: v5e:2x2
jax: 0.10.0
libtpu: 0.0.40
codegen_flags: <defaults>
</compile_context>

<pallas_src>
import functools

import jax
import jax.numpy as jnp
from jax import lax
from jax.experimental import pallas as pl
from jax.experimental.pallas import tpu as pltpu


def _eigen2x2(a, b, c, *, want_evecs):
    """Analytic eigendecomposition of the symmetric 2x2 matrix [[a, b], [b, c]].

    Returns (e1, e2, evecs) with e1 >= e2 computed by the exact quadratic
    formula used in the PyTorch reference.  `evecs` (if requested) are the
    eigenvectors matched to (e1, e2) with the reference's first-index argmin
    tie-break for exactly degenerate eigenvalues.

    # TODO(synk): eigenvector *sign* follows a fixed analytic convention
    # (v0 ~ (b, lam0 - a), v1 = 90-degree rotation of v0); torch.linalg.eigh's
    # sign is LAPACK-implementation dependent and not reproducible, so the
    # sign-sensitive eigenvector MSE terms can differ from the torch module.
    """
    tr = a + c
    det = a * c - b * b
    disc = jnp.sqrt(tr * tr - 4.0 * det)   # == sqrt((-a-c)^2 - 4*(ac - b^2))
    e1 = 0.5 * (tr + disc)                 # larger root  (eigh's lam1)
    e2 = 0.5 * (tr - disc)                 # smaller root (eigh's lam0)
    if not want_evecs:
        return e1, e2, None

    # Unit eigenvector for the smaller eigenvalue lam0 == e2: v0 ~ (b, e2 - a).
    vy_u = e2 - a
    n2 = b * b + vy_u * vy_u
    safe = n2 > 0.0
    inv = jnp.where(safe, lax.rsqrt(jnp.where(safe, n2, 1.0)), 0.0)  # EUP slot
    v0x = b * inv
    v0y = vy_u * inv
    # Diagonal matrix (b == 0): standard basis vector closest to e2.
    is_diag = b == 0.0
    pick_first = jnp.abs(e2 - a) <= jnp.abs(e2 - c)
    v0x = jnp.where(is_diag, jnp.where(pick_first, 1.0, 0.0), v0x)
    v0y = jnp.where(is_diag, jnp.where(pick_first, 0.0, 1.0), v0y)
    # Eigenvector for lam1 is the 90-degree rotation of v0 (orthogonal).
    v1x = -v0y
    v1y = v0x
    # Reference tie-break: torch.argmin picks the first (lam0) column for BOTH
    # matched eigenvectors when the eigenvalues are exactly degenerate.
    degen = e1 == e2
    m1x = jnp.where(degen, v0x, v1x)   # eigenvector matched to e1
    m1y = jnp.where(degen, v0y, v1y)
    m2x = v0x                          # eigenvector matched to e2 (always lam0)
    m2y = v0y
    return e1, e2, (m1x, m1y, m2x, m2y)


def eigh_mse_kernel(yp_ref, yt_ref, out_ref, acc_ref, *, coeffs, include_evec):
    """One grid step: (3, TS, 128) blocks of pred / true, fused weighted
    squared-error contribution accumulated per lane into an (8,128) scratch."""
    i = pl.program_id(1)

    @pl.when(i == 0)
    def _():
        acc_ref[...] = jnp.zeros_like(acc_ref)

    pa = yp_ref[0]   # (TS, 128)
    pb = yp_ref[1]
    pc = yp_ref[2]
    ta = yt_ref[0]
    tb = yt_ref[1]
    tc = yt_ref[2]

    k_evals, k_data, k_e10, k_e11, k_e20, k_e21 = coeffs

    # Data MSE contribution first so the raw inputs can die early.
    d0 = pa - ta
    d1 = pb - tb
    d2 = pc - tc
    contrib = k_data * (d0 * d0 + d1 * d1 + d2 * d2)

    p_e1, p_e2, p_vecs = _eigen2x2(pa, pb, pc, want_evecs=include_evec)
    t_e1, t_e2, t_vecs = _eigen2x2(ta, tb, tc, want_evecs=include_evec)

    de1 = p_e1 - t_e1
    de2 = p_e2 - t_e2
    contrib = contrib + k_evals * (de1 * de1 + de2 * de2)

    if include_evec:
        p1x, p1y, p2x, p2y = p_vecs
        t1x, t1y, t2x, t2y = t_vecs
        g0 = p1x - t1x
        g1 = p1y - t1y
        g2 = p2x - t2x
        g3 = p2y - t2y
        contrib = contrib + (k_e10 * g0 * g0 + k_e11 * g1 * g1
                             + k_e20 * g2 * g2 + k_e21 * g3 * g3)

    # Fold the (TS, 128) contribution into an (8, 128) running accumulator with
    # sublane-aligned static slices: no XLU reduction inside the kernel.
    ts = contrib.shape[0]
    partial = contrib[0:8, :]
    for s in range(1, ts // 8):
        partial = partial + contrib[8 * s:8 * (s + 1), :]
    acc_ref[...] += partial

    @pl.when(i == pl.num_programs(1) - 1)
    def _():
        out_ref[...] = acc_ref[...]


def eigh_mse_2_mse(y_pred, y_true, weights, *, tile_sublanes=16, num_partials=2):
    """JAX/Pallas equivalent of EighMSE_2_MSE(weights)(y_pred, y_true).

    `weights` is static host-side configuration (list / tuple / np array of 6
    floats), mirroring the torch module's constructor argument; the
    eigenvector branch is decided statically from weights[1] (as in the
    reference's Python `if`).
    """
    w = tuple(float(v) for v in weights)
    assert len(w) == 6
    include_evec = (w[1] != 0.0)

    y_pred = jnp.asarray(y_pred, jnp.float32)
    y_true = jnp.asarray(y_true, jnp.float32)
    if y_true.ndim == 1:
        y_pred = y_pred[None, :]
        y_true = y_true[None, :]
    B = y_pred.shape[0]

    TS = tile_sublanes                    # sublanes per block (multiple of 8)
    P = num_partials                      # leading parallel axis (v7x: 2 TCs)
    elems_per_step = TS * 128             # 2048 batch rows per grid step
    chunk = P * elems_per_step
    B_pad = ((B + chunk - 1) // chunk) * chunk
    n_inner = B_pad // chunk              # reduction steps per partial

    # Zero padding is exact: for a zero pred AND true matrix every per-element
    # contribution (data, eigenvalue, eigenvector) is identically zero.
    def to_lane_major(y):
        y = jnp.pad(y, ((0, B_pad - B), (0, 0)))
        return y.T.reshape(3, B_pad // 128, 128)

    yp_lm = to_lane_major(y_pred)
    yt_lm = to_lane_major(y_true)

    # Compile-time constants: weights folded with the 1/(2B), 1/(3B), 1/B means
    # (true B, not padded B).
    inv_b = 1.0 / float(B)
    coeffs = (w[0] * 0.5 * inv_b,         # eigenvalue MSE (mean over B*2)
              w[5] * inv_b / 3.0,         # data MSE       (mean over B*3)
              w[1] * inv_b, w[2] * inv_b, w[3] * inv_b, w[4] * inv_b)

    kernel = functools.partial(eigh_mse_kernel, coeffs=coeffs,
                               include_evec=include_evec)

    flops_per_elem = 90 if include_evec else 30
    transc_per_elem = 4 if include_evec else 2

    out = pl.pallas_call(
        kernel,
        out_shape=jax.ShapeDtypeStruct((P * 8, 128), jnp.float32),
        grid_spec=pltpu.PrefetchScalarGridSpec(
            num_scalar_prefetch=0,
            grid=(P, n_inner),
            in_specs=[
                pl.BlockSpec((3, TS, 128), lambda p, i: (0, p * n_inner + i, 0)),
                pl.BlockSpec((3, TS, 128), lambda p, i: (0, p * n_inner + i, 0)),
            ],
            out_specs=pl.BlockSpec((8, 128), lambda p, i: (p, 0)),
            scratch_shapes=[pltpu.VMEM((8, 128), jnp.float32)],
        ),
        compiler_params=pltpu.CompilerParams(
            dimension_semantics=("parallel", "arbitrary")),
        cost_estimate=pl.CostEstimate(
            flops=int(flops_per_elem * B_pad),
            transcendentals=int(transc_per_elem * B_pad),
            bytes_accessed=int(2 * 3 * B_pad * 4 + P * 8 * 128 * 4)),
    )(yp_lm, yt_lm)

    # Final tiny reduction over the P*8*128 per-lane partial sums.
    return jnp.sum(out)


def _reference_loss(y_pred, y_true, weights):
    """Pure-jnp reference with the same deterministic eigenvector convention."""
    w = tuple(float(v) for v in weights)
    include_evec = (w[1] != 0.0)
    y_pred = jnp.asarray(y_pred, jnp.float32)
    y_true = jnp.asarray(y_true, jnp.float32)
    pa, pb, pc = y_pred[:, 0], y_pred[:, 1], y_pred[:, 2]
    ta, tb, tc = y_true[:, 0], y_true[:, 1], y_true[:, 2]
    p_e1, p_e2, pv = _eigen2x2(pa, pb, pc, want_evecs=include_evec)
    t_e1, t_e2, tv = _eigen2x2(ta, tb, tc, want_evecs=include_evec)
    evals_mse = jnp.mean(jnp.stack([p_e1 - t_e1, p_e2 - t_e2]) ** 2)
    mse_loss = jnp.mean((y_pred - y_true) ** 2)
    total = w[0] * evals_mse + w[5] * mse_loss
    if include_evec:
        p1x, p1y, p2x, p2y = pv
        t1x, t1y, t2x, t2y = tv
        total = total + (w[1] * jnp.mean((p1x - t1x) ** 2)
                         + w[2] * jnp.mean((p1y - t1y) ** 2)
                         + w[3] * jnp.mean((p2x - t2x) ** 2)
                         + w[4] * jnp.mean((p2y - t2y) ** 2))
    return total


if __name__ == "__main__":
    key = jax.random.PRNGKey(0)
    kp, kt = jax.random.split(key)

    B = 8
    # y_pred / y_true: (B, 3) flattened symmetric 2x2 matrices [m00, m01, m11]
    y_pred = jax.random.normal(kp, (B, 3), dtype=jnp.float32)
    y_true = jax.random.normal(kt, (B, 3), dtype=jnp.float32)

    # Static loss weights [w_evals, w_evec_1_0, w_evec_1_1, w_evec_2_0,
    # w_evec_2_1, w_data_mse]; w1 != 0 exercises the eigenvector branch.
    weights = [1.0, 0.5, 0.25, 0.5, 0.25, 1.0]

    loss = eigh_mse_2_mse(y_pred, y_true, weights)
    jax.block_until_ready(loss)

    ref = _reference_loss(y_pred, y_true, weights)
    jax.block_until_ready(ref)
    if not bool(jnp.abs(loss - ref) <= 1e-4 * (1.0 + jnp.abs(ref))):
        raise AssertionError(f"mismatch: kernel={float(loss)} ref={float(ref)}")

    print("KERNEL_OK")
</pallas_src>

<mosaic_0001>
module attributes {stable_mosaic.version = 11 : i64} {
  func.func @eigh_mse_kernel(%arg0: i32, %arg1: i32, %arg2: memref<3x16x128xf32, #tpu.memory_space<vmem>>, %arg3: memref<3x16x128xf32, #tpu.memory_space<vmem>>, %arg4: memref<8x128xf32, #tpu.memory_space<vmem>>, %arg5: memref<8x128xf32, #tpu.memory_space<vmem>>) attributes {dimension_semantics = [#tpu.dimension_semantics<parallel>, #tpu.dimension_semantics<arbitrary>], iteration_bounds = array<i64: 2, 1>, scalar_prefetch = 0 : i64, scratch_operands = 1 : i64, tpu.core_type = #tpu.core_type<tc>, window_params = [{transform_indices = @transform_0, window_bounds = array<i64: 3, 16, 128>}, {transform_indices = @transform_1, window_bounds = array<i64: 3, 16, 128>}, {transform_indices = @transform_2, window_bounds = array<i64: 8, 128>}]} {
    %c0_i32 = arith.constant 0 : i32
    %0 = arith.cmpi eq, %arg1, %c0_i32 : i32
    %1 = arith.extui %0 : i1 to i32
    %c0_i32_0 = arith.constant 0 : i32
    %2 = arith.cmpi ne, %1, %c0_i32_0 : i32
    scf.if %2 {
      %cst_51 = arith.constant 0.000000e+00 : f32
      %158 = vector.broadcast %cst_51 : f32 to vector<8x128xf32>
      %c0_52 = arith.constant 0 : index
      %c0_53 = arith.constant 0 : index
      %159 = vector.load %arg5[%c0_52, %c0_53] : memref<8x128xf32, #tpu.memory_space<vmem>>, vector<8x128xf32>
      tpu.vector_store %arg5[%c0_52, %c0_53], %158 {strides = array<i32>} : memref<8x128xf32, #tpu.memory_space<vmem>>, vector<8x128xf32>,
    } else {
    }
    %c0 = arith.constant 0 : index
    %c0_1 = arith.constant 0 : index
    %c0_2 = arith.constant 0 : index
    %3 = vector.load %arg2[%c0, %c0_1, %c0_2] : memref<3x16x128xf32, #tpu.memory_space<vmem>>, vector<1x16x128xf32>
    %4 = vector.shape_cast %3 : vector<1x16x128xf32> to vector<16x128xf32>
    %c1 = arith.constant 1 : index
    %c0_3 = arith.constant 0 : index
    %c0_4 = arith.constant 0 : index
    %5 = vector.load %arg2[%c1, %c0_3, %c0_4] : memref<3x16x128xf32, #tpu.memory_space<vmem>>, vector<1x16x128xf32>
    %6 = vector.shape_cast %5 : vector<1x16x128xf32> to vector<16x128xf32>
    %c2 = arith.constant 2 : index
    %c0_5 = arith.constant 0 : index
    %c0_6 = arith.constant 0 : index
    %7 = vector.load %arg2[%c2, %c0_5, %c0_6] : memref<3x16x128xf32, #tpu.memory_space<vmem>>, vector<1x16x128xf32>
    %8 = vector.shape_cast %7 : vector<1x16x128xf32> to vector<16x128xf32>
    %c0_7 = arith.constant 0 : index
    %c0_8 = arith.constant 0 : index
    %c0_9 = arith.constant 0 : index
    %9 = vector.load %arg3[%c0_7, %c0_8, %c0_9] : memref<3x16x128xf32, #tpu.memory_space<vmem>>, vector<1x16x128xf32>
    %10 = vector.shape_cast %9 : vector<1x16x128xf32> to vector<16x128xf32>
    %c1_10 = arith.constant 1 : index
    %c0_11 = arith.constant 0 : index
    %c0_12 = arith.constant 0 : index
    %11 = vector.load %arg3[%c1_10, %c0_11, %c0_12] : memref<3x16x128xf32, #tpu.memory_space<vmem>>, vector<1x16x128xf32>
    %12 = vector.shape_cast %11 : vector<1x16x128xf32> to vector<16x128xf32>
    %c2_13 = arith.constant 2 : index
    %c0_14 = arith.constant 0 : index
    %c0_15 = arith.constant 0 : index
    %13 = vector.load %arg3[%c2_13, %c0_14, %c0_15] : memref<3x16x128xf32, #tpu.memory_space<vmem>>, vector<1x16x128xf32>
    %14 = vector.shape_cast %13 : vector<1x16x128xf32> to vector<16x128xf32>
    %15 = arith.subf %4, %10 : vector<16x128xf32>
    %16 = arith.subf %6, %12 : vector<16x128xf32>
    %17 = arith.subf %8, %14 : vector<16x128xf32>
    %18 = arith.mulf %15, %15 : vector<16x128xf32>
    %19 = arith.mulf %16, %16 : vector<16x128xf32>
    %20 = arith.addf %18, %19 : vector<16x128xf32>
    %21 = arith.mulf %17, %17 : vector<16x128xf32>
    %22 = arith.addf %20, %21 : vector<16x128xf32>
    %cst = arith.constant 0.0416666679 : f32
    %23 = vector.broadcast %cst : f32 to vector<16x128xf32>
    %24 = arith.mulf %23, %22 : vector<16x128xf32>
    %25 = arith.addf %4, %8 : vector<16x128xf32>
    %26 = arith.mulf %4, %8 : vector<16x128xf32>
    %27 = arith.mulf %6, %6 : vector<16x128xf32>
    %28 = arith.subf %26, %27 : vector<16x128xf32>
    %29 = arith.mulf %25, %25 : vector<16x128xf32>
    %cst_16 = arith.constant 4.000000e+00 : f32
    %30 = vector.broadcast %cst_16 : f32 to vector<16x128xf32>
    %31 = arith.mulf %30, %28 : vector<16x128xf32>
    %32 = arith.subf %29, %31 : vector<16x128xf32>
    %33 = math.sqrt %32 : vector<16x128xf32>
    %34 = arith.addf %25, %33 : vector<16x128xf32>
    %cst_17 = arith.constant 5.000000e-01 : f32
    %35 = vector.broadcast %cst_17 : f32 to vector<16x128xf32>
    %36 = arith.mulf %35, %34 : vector<16x128xf32>
    %37 = arith.subf %25, %33 : vector<16x128xf32>
    %cst_18 = arith.constant 5.000000e-01 : f32
    %38 = vector.broadcast %cst_18 : f32 to vector<16x128xf32>
    %39 = arith.mulf %38, %37 : vector<16x128xf32>
    %40 = arith.subf %39, %4 : vector<16x128xf32>
    %41 = arith.mulf %6, %6 : vector<16x128xf32>
    %42 = arith.mulf %40, %40 : vector<16x128xf32>
    %43 = arith.addf %41, %42 : vector<16x128xf32>
    %cst_19 = arith.constant 0.000000e+00 : f32
    %44 = vector.broadcast %cst_19 : f32 to vector<16x128xf32>
    %45 = arith.cmpf ogt, %43, %44 : vector<16x128xf32>
    %cst_20 = arith.constant 1.000000e+00 : f32
    %46 = vector.broadcast %cst_20 : f32 to vector<16x128xf32>
    %47 = arith.select %45, %43, %46 : vector<16x128xi1>, vector<16x128xf32>
    %48 = math.rsqrt %47 : vector<16x128xf32>
    %cst_21 = arith.constant 0.000000e+00 : f32
    %49 = vector.broadcast %cst_21 : f32 to vector<16x128xf32>
    %50 = arith.select %45, %48, %49 : vector<16x128xi1>, vector<16x128xf32>
    %51 = arith.mulf %6, %50 : vector<16x128xf32>
    %52 = arith.mulf %40, %50 : vector<16x128xf32>
    %cst_22 = arith.constant 0.000000e+00 : f32
    %53 = vector.broadcast %cst_22 : f32 to vector<16x128xf32>
    %54 = arith.cmpf oeq, %6, %53 : vector<16x128xf32>
    %55 = arith.subf %39, %4 : vector<16x128xf32>
    %56 = math.absf %55 : vector<16x128xf32>
    %57 = arith.subf %39, %8 : vector<16x128xf32>
    %58 = math.absf %57 : vector<16x128xf32>
    %59 = arith.cmpf ole, %56, %58 : vector<16x128xf32>
    %cst_23 = arith.constant 1.000000e+00 : f32
    %cst_24 = arith.constant 0.000000e+00 : f32
    %60 = vector.broadcast %cst_23 : f32 to vector<16x128xf32>
    %61 = vector.broadcast %cst_24 : f32 to vector<16x128xf32>
    %62 = arith.select %59, %60, %61 : vector<16x128xi1>, vector<16x128xf32>
    %63 = arith.select %54, %62, %51 : vector<16x128xi1>, vector<16x128xf32>
    %cst_25 = arith.constant 0.000000e+00 : f32
    %cst_26 = arith.constant 1.000000e+00 : f32
    %64 = vector.broadcast %cst_25 : f32 to vector<16x128xf32>
    %65 = vector.broadcast %cst_26 : f32 to vector<16x128xf32>
    %66 = arith.select %59, %64, %65 : vector<16x128xi1>, vector<16x128xf32>
    %67 = arith.select %54, %66, %52 : vector<16x128xi1>, vector<16x128xf32>
    %cst_27 = arith.constant 0.000000e+00 : f32
    %68 = vector.broadcast %cst_27 : f32 to vector<16x128xf32>
    %69 = arith.subf %68, %67 : vector<16x128xf32>
    %70 = arith.cmpf oeq, %36, %39 : vector<16x128xf32>
    %71 = arith.select %70, %63, %69 : vector<16x128xi1>, vector<16x128xf32>
    %72 = arith.select %70, %67, %63 : vector<16x128xi1>, vector<16x128xf32>
    %73 = arith.addf %10, %14 : vector<16x128xf32>
    %74 = arith.mulf %10, %14 : vector<16x128xf32>
    %75 = arith.mulf %12, %12 : vector<16x128xf32>
    %76 = arith.subf %74, %75 : vector<16x128xf32>
    %77 = arith.mulf %73, %73 : vector<16x128xf32>
    %cst_28 = arith.constant 4.000000e+00 : f32
    %78 = vector.broadcast %cst_28 : f32 to vector<16x128xf32>
    %79 = arith.mulf %78, %76 : vector<16x128xf32>
    %80 = arith.subf %77, %79 : vector<16x128xf32>
    %81 = math.sqrt %80 : vector<16x128xf32>
    %82 = arith.addf %73, %81 : vector<16x128xf32>
    %cst_29 = arith.constant 5.000000e-01 : f32
    %83 = vector.broadcast %cst_29 : f32 to vector<16x128xf32>
    %84 = arith.mulf %83, %82 : vector<16x128xf32>
    %85 = arith.subf %73, %81 : vector<16x128xf32>
    %cst_30 = arith.constant 5.000000e-01 : f32
    %86 = vector.broadcast %cst_30 : f32 to vector<16x128xf32>
    %87 = arith.mulf %86, %85 : vector<16x128xf32>
    %88 = arith.subf %87, %10 : vector<16x128xf32>
    %89 = arith.mulf %12, %12 : vector<16x128xf32>
    %90 = arith.mulf %88, %88 : vector<16x128xf32>
    %91 = arith.addf %89, %90 : vector<16x128xf32>
    %cst_31 = arith.constant 0.000000e+00 : f32
    %92 = vector.broadcast %cst_31 : f32 to vector<16x128xf32>
    %93 = arith.cmpf ogt, %91, %92 : vector<16x128xf32>
    %cst_32 = arith.constant 1.000000e+00 : f32
    %94 = vector.broadcast %cst_32 : f32 to vector<16x128xf32>
    %95 = arith.select %93, %91, %94 : vector<16x128xi1>, vector<16x128xf32>
    %96 = math.rsqrt %95 : vector<16x128xf32>
    %cst_33 = arith.constant 0.000000e+00 : f32
    %97 = vector.broadcast %cst_33 : f32 to vector<16x128xf32>
    %98 = arith.select %93, %96, %97 : vector<16x128xi1>, vector<16x128xf32>
    %99 = arith.mulf %12, %98 : vector<16x128xf32>
    %100 = arith.mulf %88, %98 : vector<16x128xf32>
    %cst_34 = arith.constant 0.000000e+00 : f32
    %101 = vector.broadcast %cst_34 : f32 to vector<16x128xf32>
    %102 = arith.cmpf oeq, %12, %101 : vector<16x128xf32>
    %103 = arith.subf %87, %10 : vector<16x128xf32>
    %104 = math.absf %103 : vector<16x128xf32>
    %105 = arith.subf %87, %14 : vector<16x128xf32>
    %106 = math.absf %105 : vector<16x128xf32>
    %107 = arith.cmpf ole, %104, %106 : vector<16x128xf32>
    %cst_35 = arith.constant 1.000000e+00 : f32
    %cst_36 = arith.constant 0.000000e+00 : f32
    %108 = vector.broadcast %cst_35 : f32 to vector<16x128xf32>
    %109 = vector.broadcast %cst_36 : f32 to vector<16x128xf32>
    %110 = arith.select %107, %108, %109 : vector<16x128xi1>, vector<16x128xf32>
    %111 = arith.select %102, %110, %99 : vector<16x128xi1>, vector<16x128xf32>
    %cst_37 = arith.constant 0.000000e+00 : f32
    %cst_38 = arith.constant 1.000000e+00 : f32
    %112 = vector.broadcast %cst_37 : f32 to vector<16x128xf32>
    %113 = vector.broadcast %cst_38 : f32 to vector<16x128xf32>
    %114 = arith.select %107, %112, %113 : vector<16x128xi1>, vector<16x128xf32>
    %115 = arith.select %102, %114, %100 : vector<16x128xi1>, vector<16x128xf32>
    %cst_39 = arith.constant 0.000000e+00 : f32
    %116 = vector.broadcast %cst_39 : f32 to vector<16x128xf32>
    %117 = arith.subf %116, %115 : vector<16x128xf32>
    %118 = arith.cmpf oeq, %84, %87 : vector<16x128xf32>
    %119 = arith.select %118, %111, %117 : vector<16x128xi1>, vector<16x128xf32>
    %120 = arith.select %118, %115, %111 : vector<16x128xi1>, vector<16x128xf32>
    %121 = arith.subf %36, %84 : vector<16x128xf32>
    %122 = arith.subf %39, %87 : vector<16x128xf32>
    %123 = arith.mulf %121, %121 : vector<16x128xf32>
    %124 = arith.mulf %122, %122 : vector<16x128xf32>
    %125 = arith.addf %123, %124 : vector<16x128xf32>
    %cst_40 = arith.constant 6.250000e-02 : f32
    %126 = vector.broadcast %cst_40 : f32 to vector<16x128xf32>
    %127 = arith.mulf %126, %125 : vector<16x128xf32>
    %128 = arith.addf %24, %127 : vector<16x128xf32>
    %129 = arith.subf %71, %119 : vector<16x128xf32>
    %130 = arith.subf %72, %120 : vector<16x128xf32>
    %131 = arith.subf %63, %111 : vector<16x128xf32>
    %132 = arith.subf %67, %115 : vector<16x128xf32>
    %cst_41 = arith.constant 6.250000e-02 : f32
    %133 = vector.broadcast %cst_41 : f32 to vector<16x128xf32>
    %134 = arith.mulf %133, %129 : vector<16x128xf32>
    %135 = arith.mulf %134, %129 : vector<16x128xf32>
    %cst_42 = arith.constant 3.125000e-02 : f32
    %136 = vector.broadcast %cst_42 : f32 to vector<16x128xf32>
    %137 = arith.mulf %136, %130 : vector<16x128xf32>
    %138 = arith.mulf %137, %130 : vector<16x128xf32>
    %139 = arith.addf %135, %138 : vector<16x128xf32>
    %cst_43 = arith.constant 6.250000e-02 : f32
    %140 = vector.broadcast %cst_43 : f32 to vector<16x128xf32>
    %141 = arith.mulf %140, %131 : vector<16x128xf32>
    %142 = arith.mulf %141, %131 : vector<16x128xf32>
    %143 = arith.addf %139, %142 : vector<16x128xf32>
    %cst_44 = arith.constant 3.125000e-02 : f32
    %144 = vector.broadcast %cst_44 : f32 to vector<16x128xf32>
    %145 = arith.mulf %144, %132 : vector<16x128xf32>
    %146 = arith.mulf %145, %132 : vector<16x128xf32>
    %147 = arith.addf %143, %146 : vector<16x128xf32>
    %148 = arith.addf %128, %147 : vector<16x128xf32>
    %149 = vector.extract_strided_slice %148 {offsets = [0, 0], sizes = [8, 128], strides = [1, 1]} : vector<16x128xf32> to vector<8x128xf32>
    %150 = vector.extract_strided_slice %148 {offsets = [8, 0], sizes = [8, 128], strides = [1, 1]} : vector<16x128xf32> to vector<8x128xf32>
    %151 = arith.addf %149, %150 : vector<8x128xf32>
    %c0_45 = arith.constant 0 : index
    %c0_46 = arith.constant 0 : index
    %152 = vector.load %arg5[%c0_45, %c0_46] : memref<8x128xf32, #tpu.memory_space<vmem>>, vector<8x128xf32>
    %153 = arith.addf %152, %151 : vector<8x128xf32>
    %c0_47 = arith.constant 0 : index
    %c0_48 = arith.constant 0 : index
    %154 = vector.load %arg5[%c0_47, %c0_48] : memref<8x128xf32, #tpu.memory_space<vmem>>, vector<8x128xf32>
    tpu.vector_store %arg5[%c0_47, %c0_48], %153 {strides = array<i32>} : memref<8x128xf32, #tpu.memory_space<vmem>>, vector<8x128xf32>,
    %c0_i32_49 = arith.constant 0 : i32
    %155 = arith.cmpi eq, %arg1, %c0_i32_49 : i32
    %156 = arith.extui %155 : i1 to i32
    %c0_i32_50 = arith.constant 0 : i32
    %157 = arith.cmpi ne, %156, %c0_i32_50 : i32
    scf.if %157 {
      %c0_51 = arith.constant 0 : index
      %c0_52 = arith.constant 0 : index
      %158 = vector.load %arg5[%c0_51, %c0_52] : memref<8x128xf32, #tpu.memory_space<vmem>>, vector<8x128xf32>
      %c0_53 = arith.constant 0 : index
      %c0_54 = arith.constant 0 : index
      %159 = vector.load %arg4[%c0_53, %c0_54] : memref<8x128xf32, #tpu.memory_space<vmem>>, vector<8x128xf32>
      tpu.vector_store %arg4[%c0_53, %c0_54], %158 {strides = array<i32>} : memref<8x128xf32, #tpu.memory_space<vmem>>, vector<8x128xf32>,
    } else {
    }
    return
  }
  func.func @transform_0(%arg0: i32, %arg1: i32) -> (i32, i32, i32) {
    %c1_i32 = arith.constant 1 : i32
    %0 = arith.muli %arg0, %c1_i32 : i32
    %1 = arith.addi %0, %arg1 : i32
    %c0_i32 = arith.constant 0 : i32
    %c0_i32_0 = arith.constant 0 : i32
    %c0_i32_1 = arith.constant 0 : i32
    return %c0_i32, %1, %c0_i32_0 : i32, i32, i32
  }
  func.func @transform_1(%arg0: i32, %arg1: i32) -> (i32, i32, i32) {
    %c1_i32 = arith.constant 1 : i32
    %0 = arith.muli %arg0, %c1_i32 : i32
    %1 = arith.addi %0, %arg1 : i32
    %c0_i32 = arith.constant 0 : i32
    %c0_i32_0 = arith.constant 0 : i32
    %c0_i32_1 = arith.constant 0 : i32
    return %c0_i32, %1, %c0_i32_0 : i32, i32, i32
  }
  func.func @transform_2(%arg0: i32, %arg1: i32) -> (i32, i32) {
    %c0_i32 = arith.constant 0 : i32
    %c0_i32_0 = arith.constant 0 : i32
    return %arg0, %c0_i32 : i32, i32
  }
}

</mosaic_0001>

<llo_original>
// kernel: tpu_custom_call.1
$region0: #{tpu_custom_call.1}
  #allocation0 [shape = 'u32[]', space=smem, size = 0x4, offset = 0x4, fixed_abs, tag = 'smem constant byte address 0x4 - core index']
  #allocation1 [shape = 'u32[72,128]{1,0:T(1,128)}', space=vmem, size = 0x9000, scoped, tag = 'internal scratch']
  #allocation2 [shape = 'f32[8,128]{1,0:T(8,128)}', space=vmem, size = 0x1000, scoped, tag = 'scratch operand']
  #allocation9 [shape = 's32[]', space=sflag, size = 0x4, offset = 0, fixed_abs, tag = 'sflag constant byte address 0x0 - dummy sync flag']
  #allocation11 [shape = 's32[]', space=sflag, size = 0x4, offset = 0, fixed_abs, tag = 'sflag constant byte address 0x0 - dummy sync flag']
  %s0 = inlined_call_operand.hbm [shape: f32[3,32,128], index: 0, kind: input, shape index: {}]
  %s1 = inlined_call_operand.hbm [shape: f32[3,32,128], index: 1, kind: input, shape index: {}]
  %s2 = inlined_call_operand.hbm [shape: f32[16,128], index: 2, kind: output, shape index: {}]
  %s3 = sld [smem:[#allocation0]]
  $region57: #{tpu_custom_call.1} parent=0
    _
  %s5 = ssub.s32 1, %s3
  %s6 = scalar_select 0, %s5, %s3
  $region1: #{tpu_custom_call.1} parent=0
    #allocation3 [shape = 'u8[49152]{0}', space=vmem, size = 0xc000, scoped, tag = 'input window, operand 0']
    #allocation4 [shape = 's32[2]{0}', space=sflag, size = 0x8, scoped, tag = 'scoped memory for tpu_custom_call.1']
    #allocation5 [shape = 's32[2]{0}', space=sflag, size = 0x8, scoped, tag = 'scoped memory for tpu_custom_call.1']
    #allocation6 [shape = 'u8[49152]{0}', space=vmem, size = 0xc000, scoped, tag = 'input window, operand 1']
    #allocation7 [shape = 's32[2]{0}', space=sflag, size = 0x8, scoped, tag = 'scoped memory for tpu_custom_call.1']
    #allocation8 [shape = 'u8[8192]{0}', space=vmem, size = 0x2000, scoped, tag = 'output window, operand 0']
    %7 = vsyncpa [#allocation4], 0
    %s8 = scalar_lea.sflag [#allocation4], 1
    %9 = vsyncpa %s8, 0
    %10 = vsyncpa [#allocation7], 0
    %s11 = scalar_lea.sflag [#allocation7], 1
    %12 = vsyncpa %s11, 0
    %13 = vsyncpa [#allocation5], 0
    %s14 = scalar_lea.sflag [#allocation5], 1
    %15 = vsyncpa %s14, 0
    loop: start=0, step=1, limit=4
    $region2: #{tpu_custom_call.1} parent=1 // loop_pre_header
      _
    $region3: #{tpu_custom_call.1} parent=1 // loop_header
      %s17 = sphi 0, %s21
      %p18 = scmp.ge.s32.totalorder %s17, 4
      %s24 = sphi 0, %s36
      %s25 = sphi 0, %s32
      %s26 = sphi 0, %s24
      %s27 = sphi 0, %s25
      %s28 = sphi 0, %s26
      %s29 = sphi 0, %s27
      %s41 = sphi 0, %s43
      %s44 = sphi 0, %s41
      %s45 = sphi 0, %s44
      %s61 = sphi 0, %s45
      %s69 = sphi 0, %s71
      %s72 = sphi 0, %s69
      %s73 = sphi 0, %s72
      %s89 = sphi 0, %s73
      %s95 = sphi 0, %s97
      %s98 = sphi 0, %s95
      %s99 = sphi 0, %s98
      %s115 = sphi 0, %s99
    $region4: #{tpu_custom_call.1} parent=1 // loop_header_branch
      %20 = sbr.rel (%p18) target = $region8
    $region5: #{tpu_custom_call.1} parent=1 // loop_body
      %s22 = ssub.s32 %s17, 1
      %s23 = ssub.s32 %s17, 2
      %s30 = sadd.s32 1, %s25
      %p31 = scmp.ge.s32.totalorder %s30, 1
      %s32 = scalar_select %p31, 0, %s30
      %s33 = sadd.s32 1, %s24
      %s34 = scalar_select %p31, %s33, %s24
      %p35 = scmp.ge.s32.totalorder %s34, 2
      %s36 = scalar_select %p35, 0, %s34
      %s37 = sadd.s32 %s24, %s25
      %s38 = sadd.s32 %s36, %s32
      %s39 = ssub.s32 %s37, %s38
      %p40 = scmp.eq.s32.totalorder %s39, 0
      %s42 = sadd.s32 %s41, 1
      %s43 = scalar_select %p40, %s41, %s42
      %p46 = pneg %p40
      %p47 = scmp.eq.s32.totalorder %s17, 1
      %p48 = por %p46, %p47
      %p49 = scmp.ne.s32.totalorder %s41, %s44
      %p50 = scmp.eq.s32.totalorder %s17, 0
      %p51 = por %p49, %p50
      %p52 = scmp.ne.s32.totalorder %s41, %s44
      %p53 = scmp.eq.s32.totalorder %s22, 1
      %p54 = por %p52, %p53
      %p55 = scmp.ne.s32.totalorder %s44, %s45
      %p56 = scmp.eq.s32.totalorder %s22, 0
      %p57 = por %p55, %p56
      %p58 = scmp.ne.s32.totalorder %s44, %s45
      %p59 = scmp.eq.s32.totalorder %s23, 1
      %p60 = por %p58, %p59
      %p62 = scmp.ne.s32.totalorder %s45, %s61
      %p63 = scmp.eq.s32.totalorder %s23, 0
      %p64 = por %p62, %p63
      %s65 = sadd.s32 %s24, %s25
      %s66 = sadd.s32 %s36, %s32
      %s67 = ssub.s32 %s65, %s66
      %p68 = scmp.eq.s32.totalorder %s67, 0
      %s70 = sadd.s32 %s69, 1
      %s71 = scalar_select %p68, %s69, %s70
      %p74 = pneg %p68
      %p75 = scmp.eq.s32.totalorder %s17, 1
      %p76 = por %p74, %p75
      %p77 = scmp.ne.s32.totalorder %s69, %s72
      %p78 = scmp.eq.s32.totalorder %s17, 0
      %p79 = por %p77, %p78
      %p80 = scmp.ne.s32.totalorder %s69, %s72
      %p81 = scmp.eq.s32.totalorder %s22, 1
      %p82 = por %p80, %p81
      %p83 = scmp.ne.s32.totalorder %s72, %s73
      %p84 = scmp.eq.s32.totalorder %s22, 0
      %p85 = por %p83, %p84
      %p86 = scmp.ne.s32.totalorder %s72, %s73
      %p87 = scmp.eq.s32.totalorder %s23, 1
      %p88 = por %p86, %p87
      %p90 = scmp.ne.s32.totalorder %s73, %s89
      %p91 = scmp.eq.s32.totalorder %s23, 0
      %p92 = por %p90, %p91
      %s93 = ssub.s32 %s24, %s36
      %p94 = scmp.eq.s32.totalorder %s93, 0
      %s96 = sadd.s32 %s95, 1
      %s97 = scalar_select %p94, %s95, %s96
      %p100 = pneg %p94
      %p101 = scmp.eq.s32.totalorder %s17, 1
      %p102 = por %p100, %p101
      %p103 = scmp.ne.s32.totalorder %s95, %s98
      %p104 = scmp.eq.s32.totalorder %s17, 0
      %p105 = por %p103, %p104
      %p106 = scmp.ne.s32.totalorder %s95, %s98
      %p107 = scmp.eq.s32.totalorder %s22, 1
      %p108 = por %p106, %p107
      %p109 = scmp.ne.s32.totalorder %s98, %s99
      %p110 = scmp.eq.s32.totalorder %s22, 0
      %p111 = por %p109, %p110
      %p112 = scmp.ne.s32.totalorder %s98, %s99
      %p113 = scmp.eq.s32.totalorder %s23, 1
      %p114 = por %p112, %p113
      %p116 = scmp.ne.s32.totalorder %s99, %s115
      %p117 = scmp.eq.s32.totalorder %s23, 0
      %p118 = por %p116, %p117
      %p119 = scmp.le.s32.totalorder 1, %s17
      %p120 = scmp.lt.s32.totalorder %s17, 3
      %p121 = pnand %p119, %p120
      %p122 = pneg %p121
      // Predicated region
      $region9: #{tpu_custom_call.1} parent=5 // pred_check
        _
      $region10: #{tpu_custom_call.1} parent=5 // pred_check_branch
        %124 = sbr.rel (%p121) target = $region12
      $region11: #{tpu_custom_call.1} parent=5 // pred_region
        %s125 = ssub.s32 %s17, 1
      $region12: #{tpu_custom_call.1} parent=5 // pred_fallthru
        _
      %p126 = scmp.lt.s32.totalorder %s17, 2
      // Predicated region
      $region13: #{tpu_custom_call.1} parent=5 // pred_check
        %p127 = pneg %p126
      $region14: #{tpu_custom_call.1} parent=5 // pred_check_branch
        %129 = sbr.rel (%p127) target = $region16
      $region15: #{tpu_custom_call.1} parent=5 // pred_region
        // Predicated region
        $region17: #{tpu_custom_call.1} parent=15 // pred_check
          %p130 = pneg %p51
        $region18: #{tpu_custom_call.1} parent=15 // pred_check_branch
          %132 = sbr.rel (%p130) target = $region20
        $region19: #{tpu_custom_call.1} parent=15 // pred_region
          #allocation10 [shape = 'u32[6]{0}', space=smem, size = 0x18, scoped, tag = 'DMA stride descriptor']
          %s133 = sand.u32 %s41, 1
          %s134 = scalar_lea.sflag [#allocation4], %s133
          %s135 = sand.u32 %s41, 1
          %s136 = smul.addr %s135, 48
          %s137 = scalar_lea.vmem [#allocation3], %s136
          %s138 = sadd.s32 %s24, %s25
          %s139 = smul.u32 2, %s138
          %141 = vsyncadd %s134, 0
          %s142 = smul.addr %s139, 8
          %s143 = scalar_lea.hbm %s0, %s142
          %s145 = sshll.u32 1, 14
          %s146 = sxor.u32 4294967295, %s145
          %s148 = sld [smem:[#allocation0]]
          %s149 = sadd.s32 2, %s148
          %s151 = sshll.u32 7, 26
          %s152 = sxor.u32 4294967295, %s151
          %s153 = sand.u32 0, %s152
          %s154 = sshll.u32 %s149, 26
          %s155 = sor.u32 %s153, %s154
          %s156 = sshll.u32 %s143, 4
          %s157 = int_to_ptr.hbm [resolvable:$true] %s156
          %s158 = sshll.u32 %s137, 4
          %s159 = int_to_ptr.vmem [resolvable:$true] %s158
          %165 = sst [smem:[#allocation10]] 512
          %s166 = scalar_lea.smem [#allocation10], 1
          %167 = sst [smem:[%s166]] 256
          %s168 = scalar_lea.smem [#allocation10], 2
          %169 = sst [smem:[%s168]] 2
          %s170 = scalar_lea.smem [#allocation10], 3
          %171 = sst [smem:[%s170]] 128
          %s172 = scalar_lea.smem [#allocation10], 4
          %173 = sst [smem:[%s172]] 128
          %s174 = scalar_lea.smem [#allocation10], 5
          %175 = sst [smem:[%s174]] 8
          %177 = dma.general %s157, 768, %s159, %s134, [#allocation9], [#allocation10], %s155, 0
        $region20: #{tpu_custom_call.1} parent=15 // pred_fallthru
          _
        // Predicated region
        $region21: #{tpu_custom_call.1} parent=15 // pred_check
          %p178 = pneg %p79
        $region22: #{tpu_custom_call.1} parent=15 // pred_check_branch
          %180 = sbr.rel (%p178) target = $region24
        $region23: #{tpu_custom_call.1} parent=15 // pred_region
          #allocation12 [shape = 'u32[6]{0}', space=smem, size = 0x18, scoped, tag = 'DMA stride descriptor']
          %s181 = sand.u32 %s69, 1
          %s182 = scalar_lea.sflag [#allocation7], %s181
          %s183 = sand.u32 %s69, 1
          %s184 = smul.addr %s183, 48
          %s185 = scalar_lea.vmem [#allocation6], %s184
          %s186 = sadd.s32 %s24, %s25
          %s187 = smul.u32 2, %s186
          %189 = vsyncadd %s182, 0
          %s190 = smul.addr %s187, 8
          %s191 = scalar_lea.hbm %s1, %s190
          %s193 = sshll.u32 1, 14
          %s194 = sxor.u32 4294967295, %s193
          %s196 = sld [smem:[#allocation0]]
          %s197 = sadd.s32 2, %s196
          %s199 = sshll.u32 7, 26
          %s200 = sxor.u32 4294967295, %s199
          %s201 = sand.u32 0, %s200
          %s202 = sshll.u32 %s197, 26
          %s203 = sor.u32 %s201, %s202
          %s204 = sshll.u32 %s191, 4
          %s205 = int_to_ptr.hbm [resolvable:$true] %s204
          %s206 = sshll.u32 %s185, 4
          %s207 = int_to_ptr.vmem [resolvable:$true] %s206
          %213 = sst [smem:[#allocation12]] 512
          %s214 = scalar_lea.smem [#allocation12], 1
          %215 = sst [smem:[%s214]] 256
          %s216 = scalar_lea.smem [#allocation12], 2
          %217 = sst [smem:[%s216]] 2
          %s218 = scalar_lea.smem [#allocation12], 3
          %219 = sst [smem:[%s218]] 128
          %s220 = scalar_lea.smem [#allocation12], 4
          %221 = sst [smem:[%s220]] 128
          %s222 = scalar_lea.smem [#allocation12], 5
          %223 = sst [smem:[%s222]] 8
          %225 = dma.general %s205, 768, %s207, %s182, [#allocation11], [#allocation12], %s203, 0
        $region24: #{tpu_custom_call.1} parent=15 // pred_fallthru
          _
      $region16: #{tpu_custom_call.1} parent=5 // pred_fallthru
        _
      %p226 = scmp.le.s32.totalorder 1, %s17
      %p227 = scmp.lt.s32.totalorder %s17, 3
      %p228 = pnand %p226, %p227
      %p229 = pneg %p228
      // Predicated region
      $region25: #{tpu_custom_call.1} parent=5 // pred_check
        _
      $region26: #{tpu_custom_call.1} parent=5 // pred_check_branch
        %231 = sbr.rel (%p228) target = $region28
      $region27: #{tpu_custom_call.1} parent=5 // pred_region
        %s232 = ssub.s32 %s17, 1
        %s233 = sand.u32 %s44, 1
        %s234 = scalar_lea.sflag [#allocation4], %s233
        %s235 = sand.u32 %s44, 1
        %s236 = smul.addr %s235, 48
        %s237 = scalar_lea.vmem [#allocation3], %s236
        // Predicated region
        $region29: #{tpu_custom_call.1} parent=27 // pred_check
          %p238 = pneg %p57
        $region30: #{tpu_custom_call.1} parent=27 // pred_check_branch
          %240 = sbr.rel (%p238) target = $region32
        $region31: #{tpu_custom_call.1} parent=27 // pred_region
          %242 = dma.done %s234, 768
        $region32: #{tpu_custom_call.1} parent=27 // pred_fallthru
          _
        %s243 = sand.u32 %s72, 1
        %s244 = scalar_lea.sflag [#allocation7], %s243
        %s245 = sand.u32 %s72, 1
        %s246 = smul.addr %s245, 48
        %s247 = scalar_lea.vmem [#allocation6], %s246
        // Predicated region
        $region33: #{tpu_custom_call.1} parent=27 // pred_check
          %p248 = pneg %p85
        $region34: #{tpu_custom_call.1} parent=27 // pred_check_branch
          %250 = sbr.rel (%p248) target = $region36
        $region35: #{tpu_custom_call.1} parent=27 // pred_region
          %252 = dma.done %s244, 768
        $region36: #{tpu_custom_call.1} parent=27 // pred_fallthru
          _
        %s253 = sand.u32 %s44, 1
        %s254 = scalar_lea.sflag [#allocation4], %s253
        %s255 = sand.u32 %s44, 1
        %s256 = smul.addr %s255, 48
        %s257 = scalar_lea.vmem [#allocation3], %s256
        %p258 = pneg %p57
        %p259 = pneg %p54
        %s260 = sand.u32 %s72, 1
        %s261 = scalar_lea.sflag [#allocation7], %s260
        %s262 = sand.u32 %s72, 1
        %s263 = smul.addr %s262, 48
        %s264 = scalar_lea.vmem [#allocation6], %s263
        %p265 = pneg %p85
        %p266 = pneg %p82
        %p267 = pneg %p111
        %p268 = pneg %p108
        %s269 = sand.u32 %s98, 1
        %s270 = scalar_lea.sflag [#allocation5], %s269
        %s271 = sand.u32 %s98, 1
        %s272 = smul.addr %s271, 8
        %s273 = scalar_lea.vmem [#allocation8], %s272
        %s274 = sadd.s32 %s26, %s27
        %s275 = smul.u32 2, %s274
        %s276 = sadd.s32 %s26, %s27
        %s277 = smul.u32 2, %s276
        %p278 = scmp.eq.s32.totalorder %s27, 0
        // Predicated region
        $region37: #{tpu_custom_call.1} parent=27 // pred_check
          %p279 = pneg %p278
        $region38: #{tpu_custom_call.1} parent=27 // pred_check_branch
          %281 = sbr.rel (%p279) target = $region40
        $region39: #{tpu_custom_call.1} parent=27 // pred_region
          %282 = vst [vmem:[#allocation2] sm:$0xff] 0.0
        $region40: #{tpu_custom_call.1} parent=27 // pred_fallthru
          _
        %v283 = vld [vmem:[%s237] sm:$0xff]
        %v284 = vld [vmem:[%s237 + $0x8] sm:$0xff]
        %s285 = scalar_lea.vmem %s237, 16 [#allocation3]
        %v286 = vld [vmem:[%s285] sm:$0xff]
        %v287 = vld [vmem:[%s285 + $0x8] sm:$0xff]
        %s288 = scalar_lea.vmem %s237, 32 [#allocation3]
        %v289 = vld [vmem:[%s288] sm:$0xff]
        %v290 = vld [vmem:[%s288 + $0x8] sm:$0xff]
        %v291 = vld [vmem:[%s247] sm:$0xff]
        %v292 = vld [vmem:[%s247 + $0x8] sm:$0xff]
        %s293 = scalar_lea.vmem %s247, 16 [#allocation6]
        %v294 = vld [vmem:[%s293] sm:$0xff]
        %v295 = vld [vmem:[%s293 + $0x8] sm:$0xff]
        %s296 = scalar_lea.vmem %s247, 32 [#allocation6]
        %v297 = vld [vmem:[%s296] sm:$0xff]
        %v298 = vld [vmem:[%s296 + $0x8] sm:$0xff]
        %v299 = vsub.f32 %v283, %v291
        %v300 = vsub.f32 %v284, %v292
        %v301 = vsub.f32 %v286, %v294
        %v302 = vsub.f32 %v287, %v295
        %v303 = vsub.f32 %v289, %v297
        %v304 = vsub.f32 %v290, %v298
        %v305 = vmul.f32 %v299, %v299
        %v306 = vmul.f32 %v300, %v300
        %v307 = vmul.f32 %v301, %v301
        %v308 = vmul.f32 %v302, %v302
        %v309 = vadd.f32 %v305, %v307
        %v310 = vadd.f32 %v306, %v308
        %v311 = vmul.f32 %v303, %v303
        %v312 = vmul.f32 %v304, %v304
        %v313 = vadd.f32 %v309, %v311
        %v314 = vadd.f32 %v310, %v312
        %v315 = vmul.f32 %v313, 0.041666668
        %v316 = vmul.f32 %v314, 0.041666668
        %v317 = vadd.f32 %v283, %v289
        %v318 = vadd.f32 %v284, %v290
        %v319 = vmul.f32 %v283, %v289
        %v320 = vmul.f32 %v284, %v290
        %v321 = vmul.f32 %v286, %v286
        %v322 = vmul.f32 %v287, %v287
        %v323 = vsub.f32 %v319, %v321
        %v324 = vsub.f32 %v320, %v322
        %v325 = vmul.f32 %v317, %v317
        %v326 = vmul.f32 %v318, %v318
        %v327 = vmul.f32 %v323, 4.0
        %v328 = vmul.f32 %v324, 4.0
        %v329 = vsub.f32 %v325, %v327
        %v330 = vsub.f32 %v326, %v328
        %v331 = vrsqrt.pop %v329
        %v332 = vmul.f32 %v331, %v329
        %v333 = vmul.f32 %v332, %v331
        %v334 = vmul.f32 0.5, %v333
        %v335 = vsub.f32 1.5, %v334
        %v336 = vmul.f32 %v331, %v335
        %v337 = vmul.f32 %v329, %v336
        %vm338 = vcmp.eq.f32.partialorder %v329, inf
        %v339 = vsel %vm338, %v329, %v337
        %vm340 = vcmp.eq.f32.partialorder %v329, 0.0
        %v341 = vand.u32 %v329, 2147483648
        %v342 = vsel %vm340, %v341, %v339
        %v343 = vrsqrt.pop %v330
        %v344 = vmul.f32 %v343, %v330
        %v345 = vmul.f32 %v344, %v343
        %v346 = vmul.f32 0.5, %v345
        %v347 = vsub.f32 1.5, %v346
        %v348 = vmul.f32 %v343, %v347
        %v349 = vmul.f32 %v330, %v348
        %vm350 = vcmp.eq.f32.partialorder %v330, inf
        %v351 = vsel %vm350, %v330, %v349
        %vm352 = vcmp.eq.f32.partialorder %v330, 0.0
        %v353 = vand.u32 %v330, 2147483648
        %v354 = vsel %vm352, %v353, %v351
        %v355 = vadd.f32 %v317, %v342
        %v356 = vadd.f32 %v318, %v354
        %v357 = vmul.f32 %v355, 0.5
        %v358 = vmul.f32 %v356, 0.5
        %v359 = vsub.f32 %v317, %v342
        %v360 = vsub.f32 %v318, %v354
        %v361 = vmul.f32 %v359, 0.5
        %v362 = vmul.f32 %v360, 0.5
        %v363 = vsub.f32 %v361, %v283
        %v364 = vsub.f32 %v362, %v284
        %v365 = vmul.f32 %v363, %v363
        %v366 = vmul.f32 %v364, %v364
        %v367 = vadd.f32 %v321, %v365
        %v368 = vadd.f32 %v322, %v366
        %vm369 = vcmp.gt.f32.partialorder %v367, 0.0
        %vm370 = vcmp.gt.f32.partialorder %v368, 0.0
        %v371 = vsel %vm369, %v367, 1.0
        %v372 = vsel %vm370, %v368, 1.0
        %v373 = vrsqrt.pop %v371
        %v374 = vmul.f32 %v373, %v371
        %v375 = vmul.f32 %v374, %v373
        %v376 = vmul.f32 0.5, %v375
        %v377 = vsub.f32 1.5, %v376
        %v378 = vmul.f32 %v373, %v377
        %vm379 = vweird.f32 %v371
        %vm380 = vweird.f32 %v373
        %vm381 = vmor %vm379, %vm380
        %v382 = vsel %vm381, %v373, %v378
        %v383 = vrsqrt.pop %v372
        %v384 = vmul.f32 %v383, %v372
        %v385 = vmul.f32 %v384, %v383
        %v386 = vmul.f32 0.5, %v385
        %v387 = vsub.f32 1.5, %v386
        %v388 = vmul.f32 %v383, %v387
        %vm389 = vweird.f32 %v372
        %vm390 = vweird.f32 %v383
        %vm391 = vmor %vm389, %vm390
        %v392 = vsel %vm391, %v383, %v388
        %v393 = vsel %vm369, %v382, 0.0
        %v394 = vsel %vm370, %v392, 0.0
        %v395 = vmul.f32 %v286, %v393
        %v396 = vmul.f32 %v287, %v394
        %v397 = vmul.f32 %v363, %v393
        %v398 = vmul.f32 %v364, %v394
        %vm399 = vcmp.eq.f32.partialorder %v286, 0.0
        %vm400 = vcmp.eq.f32.partialorder %v287, 0.0
        %v401 = vand.u32 2147483647, %v363
        %v402 = vand.u32 2147483647, %v364
        %v403 = vsub.f32 %v361, %v289
        %v404 = vsub.f32 %v362, %v290
        %v405 = vand.u32 2147483647, %v403
        %v406 = vand.u32 2147483647, %v404
        %vm407 = vcmp.le.f32.partialorder %v401, %v405
        %vm408 = vcmp.le.f32.partialorder %v402, %v406
        %v409 = vsel %vm407, 1.0, 0.0
        %v410 = vsel %vm408, 1.0, 0.0
        %v411 = vsel %vm399, %v409, %v395
        %v412 = vsel %vm400, %v410, %v396
        %v413 = vsel %vm407, 0.0, 1.0
        %v414 = vsel %vm408, 0.0, 1.0
        %v415 = vsel %vm399, %v413, %v397
        %v416 = vsel %vm400, %v414, %v398
        %v417 = vsub.f32 0.0, %v415
        %v418 = vsub.f32 0.0, %v416
        %vm419 = vcmp.eq.f32.partialorder %v357, %v361
        %vm420 = vcmp.eq.f32.partialorder %v358, %v362
        %v421 = vsel %vm419, %v411, %v417
        %v422 = vsel %vm420, %v412, %v418
        %v423 = vsel %vm419, %v415, %v411
        %v424 = vsel %vm420, %v416, %v412
        %v425 = vadd.f32 %v291, %v297
        %v426 = vadd.f32 %v292, %v298
        %v427 = vmul.f32 %v291, %v297
        %v428 = vmul.f32 %v292, %v298
        %v429 = vmul.f32 %v294, %v294
        %v430 = vmul.f32 %v295, %v295
        %v431 = vsub.f32 %v427, %v429
        %v432 = vsub.f32 %v428, %v430
        %v433 = vmul.f32 %v425, %v425
        %v434 = vmul.f32 %v426, %v426
        %v435 = vmul.f32 %v431, 4.0
        %v436 = vmul.f32 %v432, 4.0
        %v437 = vsub.f32 %v433, %v435
        %v438 = vsub.f32 %v434, %v436
        %v439 = vrsqrt.pop %v437
        %v440 = vmul.f32 %v439, %v437
        %v441 = vmul.f32 %v440, %v439
        %v442 = vmul.f32 0.5, %v441
        %v443 = vsub.f32 1.5, %v442
        %v444 = vmul.f32 %v439, %v443
        %v445 = vmul.f32 %v437, %v444
        %vm446 = vcmp.eq.f32.partialorder %v437, inf
        %v447 = vsel %vm446, %v437, %v445
        %vm448 = vcmp.eq.f32.partialorder %v437, 0.0
        %v449 = vand.u32 %v437, 2147483648
        %v450 = vsel %vm448, %v449, %v447
        %v451 = vrsqrt.pop %v438
        %v452 = vmul.f32 %v451, %v438
        %v453 = vmul.f32 %v452, %v451
        %v454 = vmul.f32 0.5, %v453
        %v455 = vsub.f32 1.5, %v454
        %v456 = vmul.f32 %v451, %v455
        %v457 = vmul.f32 %v438, %v456
        %vm458 = vcmp.eq.f32.partialorder %v438, inf
        %v459 = vsel %vm458, %v438, %v457
        %vm460 = vcmp.eq.f32.partialorder %v438, 0.0
        %v461 = vand.u32 %v438, 2147483648
        %v462 = vsel %vm460, %v461, %v459
        %v463 = vadd.f32 %v425, %v450
        %v464 = vadd.f32 %v426, %v462
        %v465 = vmul.f32 %v463, 0.5
        %v466 = vmul.f32 %v464, 0.5
        %v467 = vsub.f32 %v425, %v450
        %v468 = vsub.f32 %v426, %v462
        %v469 = vmul.f32 %v467, 0.5
        %v470 = vmul.f32 %v468, 0.5
        %v471 = vsub.f32 %v469, %v291
        %v472 = vsub.f32 %v470, %v292
        %v473 = vmul.f32 %v471, %v471
        %v474 = vmul.f32 %v472, %v472
        %v475 = vadd.f32 %v429, %v473
        %v476 = vadd.f32 %v430, %v474
        %vm477 = vcmp.gt.f32.partialorder %v475, 0.0
        %vm478 = vcmp.gt.f32.partialorder %v476, 0.0
        %v479 = vsel %vm477, %v475, 1.0
        %v480 = vsel %vm478, %v476, 1.0
        %v481 = vrsqrt.pop %v479
        %v482 = vmul.f32 %v481, %v479
        %v483 = vmul.f32 %v482, %v481
        %v484 = vmul.f32 0.5, %v483
        %v485 = vsub.f32 1.5, %v484
        %v486 = vmul.f32 %v481, %v485
        %vm487 = vweird.f32 %v479
        %vm488 = vweird.f32 %v481
        %vm489 = vmor %vm487, %vm488
        %v490 = vsel %vm489, %v481, %v486
        %v491 = vrsqrt.pop %v480
        %v492 = vmul.f32 %v491, %v480
        %v493 = vmul.f32 %v492, %v491
        %v494 = vmul.f32 0.5, %v493
        %v495 = vsub.f32 1.5, %v494
        %v496 = vmul.f32 %v491, %v495
        %vm497 = vweird.f32 %v480
        %vm498 = vweird.f32 %v491
        %vm499 = vmor %vm497, %vm498
        %v500 = vsel %vm499, %v491, %v496
        %v501 = vsel %vm477, %v490, 0.0
        %v502 = vsel %vm478, %v500, 0.0
        %v503 = vmul.f32 %v294, %v501
        %v504 = vmul.f32 %v295, %v502
        %v505 = vmul.f32 %v471, %v501
        %v506 = vmul.f32 %v472, %v502
        %vm507 = vcmp.eq.f32.partialorder %v294, 0.0
        %vm508 = vcmp.eq.f32.partialorder %v295, 0.0
        %v509 = vand.u32 2147483647, %v471
        %v510 = vand.u32 2147483647, %v472
        %v511 = vsub.f32 %v469, %v297
        %v512 = vsub.f32 %v470, %v298
        %v513 = vand.u32 2147483647, %v511
        %v514 = vand.u32 2147483647, %v512
        %vm515 = vcmp.le.f32.partialorder %v509, %v513
        %vm516 = vcmp.le.f32.partialorder %v510, %v514
        %v517 = vsel %vm515, 1.0, 0.0
        %v518 = vsel %vm516, 1.0, 0.0
        %v519 = vsel %vm507, %v517, %v503
        %v520 = vsel %vm508, %v518, %v504
        %v521 = vsel %vm515, 0.0, 1.0
        %v522 = vsel %vm516, 0.0, 1.0
        %v523 = vsel %vm507, %v521, %v505
        %v524 = vsel %vm508, %v522, %v506
        %v525 = vsub.f32 0.0, %v523
        %v526 = vsub.f32 0.0, %v524
        %vm527 = vcmp.eq.f32.partialorder %v465, %v469
        %vm528 = vcmp.eq.f32.partialorder %v466, %v470
        %v529 = vsel %vm527, %v519, %v525
        %v530 = vsel %vm528, %v520, %v526
        %v531 = vsel %vm527, %v523, %v519
        %v532 = vsel %vm528, %v524, %v520
        %v533 = vsub.f32 %v357, %v465
        %v534 = vsub.f32 %v358, %v466
        %v535 = vsub.f32 %v361, %v469
        %v536 = vsub.f32 %v362, %v470
        %v537 = vmul.f32 %v533, %v533
        %v538 = vmul.f32 %v534, %v534
        %v539 = vmul.f32 %v535, %v535
        %v540 = vmul.f32 %v536, %v536
        %v541 = vadd.f32 %v537, %v539
        %v542 = vadd.f32 %v538, %v540
        %v543 = vmul.f32 %v541, 0.0625
        %v544 = vmul.f32 %v542, 0.0625
        %v545 = vadd.f32 %v315, %v543
        %v546 = vadd.f32 %v316, %v544
        %v547 = vsub.f32 %v421, %v529
        %v548 = vsub.f32 %v422, %v530
        %v549 = vsub.f32 %v423, %v531
        %v550 = vsub.f32 %v424, %v532
        %v551 = vsub.f32 %v411, %v519
        %v552 = vsub.f32 %v412, %v520
        %v553 = vsub.f32 %v415, %v523
        %v554 = vsub.f32 %v416, %v524
        %v555 = vmul.f32 %v547, 0.0625
        %v556 = vmul.f32 %v548, 0.0625
        %v557 = vmul.f32 %v555, %v547
        %v558 = vmul.f32 %v556, %v548
        %v559 = vmul.f32 %v549, 0.03125
        %v560 = vmul.f32 %v550, 0.03125
        %v561 = vmul.f32 %v559, %v549
        %v562 = vmul.f32 %v560, %v550
        %v563 = vadd.f32 %v557, %v561
        %v564 = vadd.f32 %v558, %v562
        %v565 = vmul.f32 %v551, 0.0625
        %v566 = vmul.f32 %v552, 0.0625
        %v567 = vmul.f32 %v565, %v551
        %v568 = vmul.f32 %v566, %v552
        %v569 = vadd.f32 %v563, %v567
        %v570 = vadd.f32 %v564, %v568
        %v571 = vmul.f32 %v553, 0.03125
        %v572 = vmul.f32 %v554, 0.03125
        %v573 = vmul.f32 %v571, %v553
        %v574 = vmul.f32 %v572, %v554
        %v575 = vadd.f32 %v569, %v573
        %v576 = vadd.f32 %v570, %v574
        %v577 = vadd.f32 %v545, %v575
        %v578 = vadd.f32 %v546, %v576
        %v579 = vadd.f32 %v577, %v578
        %v580 = vld [vmem:[#allocation2] sm:$0xff]
        %v581 = vadd.f32 %v580, %v579
        %582 = vst [vmem:[#allocation2] sm:$0xff] %v581
        // Predicated region
        $region41: #{tpu_custom_call.1} parent=27 // pred_check
          %p583 = pneg %p278
        $region42: #{tpu_custom_call.1} parent=27 // pred_check_branch
          %585 = sbr.rel (%p583) target = $region44
        $region43: #{tpu_custom_call.1} parent=27 // pred_region
          %v586 = vld [vmem:[#allocation2] sm:$0xff]
          %587 = vst [vmem:[%s273] sm:$0xff] %v586
        $region44: #{tpu_custom_call.1} parent=27 // pred_fallthru
          _
        %s588 = sand.u32 %s98, 1
        %s589 = scalar_lea.sflag [#allocation5], %s588
        %s590 = sand.u32 %s98, 1
        %s591 = smul.addr %s590, 8
        %s592 = scalar_lea.vmem [#allocation8], %s591
        // Predicated region
        $region45: #{tpu_custom_call.1} parent=27 // pred_check
          %p593 = pneg %p108
        $region46: #{tpu_custom_call.1} parent=27 // pred_check_branch
          %595 = sbr.rel (%p593) target = $region48
        $region47: #{tpu_custom_call.1} parent=27 // pred_region
          %597 = vsyncadd %s589, 0
          %s598 = smul.addr %s26, 8
          %s599 = scalar_lea.hbm %s2, %s598
          %s601 = sshll.u32 %s592, 4
          %s602 = int_to_ptr.vmem [resolvable:$true] %s601
          %s603 = sshll.u32 %s599, 4
          %s604 = int_to_ptr.hbm [resolvable:$true] %s603
          %606 = dma.vmem_to_hbm [thread:$0]  %s602, 128, %s604, %s589
        $region48: #{tpu_custom_call.1} parent=27 // pred_fallthru
          _
      $region28: #{tpu_custom_call.1} parent=5 // pred_fallthru
        _
      %p607 = scmp.le.s32.totalorder 2, %s17
      // Predicated region
      $region49: #{tpu_custom_call.1} parent=5 // pred_check
        %p608 = pneg %p607
      $region50: #{tpu_custom_call.1} parent=5 // pred_check_branch
        %610 = sbr.rel (%p608) target = $region52
      $region51: #{tpu_custom_call.1} parent=5 // pred_region
        %s611 = ssub.s32 %s17, 2
        // Predicated region
        $region53: #{tpu_custom_call.1} parent=51 // pred_check
          %p612 = pneg %p114
        $region54: #{tpu_custom_call.1} parent=51 // pred_check_branch
          %614 = sbr.rel (%p612) target = $region56
        $region55: #{tpu_custom_call.1} parent=51 // pred_region
          %s615 = sand.u32 %s99, 1
          %s616 = scalar_lea.sflag [#allocation5], %s615
          %s617 = sand.u32 %s99, 1
          %s618 = smul.addr %s617, 8
          %s619 = scalar_lea.vmem [#allocation8], %s618
          %621 = dma.done %s616, 128
        $region56: #{tpu_custom_call.1} parent=51 // pred_fallthru
          _
      $region52: #{tpu_custom_call.1} parent=5 // pred_fallthru
        _
    $region6: #{tpu_custom_call.1} parent=1 // loop_footer
      %s21 = sadd.s32 1, %s17
    $region7: #{tpu_custom_call.1} parent=1 // loop_footer_branch
      %16 = sbr.rel target = $region3
    $region8: #{tpu_custom_call.1} parent=1 // loop_exit
      _
    %622 = vsyncpa [#allocation4], 1
    %s623 = scalar_lea.sflag [#allocation4], 1
    %624 = vsyncpa %s623, 1
    %625 = vsyncpa [#allocation7], 1
    %s626 = scalar_lea.sflag [#allocation7], 1
    %627 = vsyncpa %s626, 1
    %628 = vsyncpa [#allocation5], 1
    %s629 = scalar_lea.sflag [#allocation5], 1
    %630 = vsyncpa %s629, 1

</llo_original>
